<compile_context>
chip_gen: v5e
topology: v5e:2x2
jax: 0.10.0
libtpu: 0.0.40
codegen_flags: <defaults>
</compile_context>

<pallas_src>
import jax
import jax.numpy as jnp
from jax import lax
from jax.experimental import pallas as pl
from jax.experimental.pallas import tpu as pltpu


def fused_mlp_kernel(cells_ref, w_ref, bias_ref, bout_ref, o_ref):
    f32 = jnp.float32
    bf16 = jnp.bfloat16
    tm, vh = cells_ref.shape            # (tm, (V-2)*H) int8 board cells for this tile
    d = w_ref.shape[-1]                 # linear_input_size
    kp1 = d // vh                       # num_kind + 1

    # ---- build the one-hot input x:(tm, D) in-kernel (never hits HBM) --------
    # For board cell c (= v*H + h) with kind value q, the hot column is
    # c*kp1 + q.  Gather that per-column target via a constant 0/1 selection
    # matmul (tiny, f32 HIGHEST precision -> exact integers), then compare
    # against the column iota on the VPU.  No div/mod, no lane gather.
    cells = cells_ref[...].astype(f32)                                   # (tm, VH)
    c_idx = lax.broadcasted_iota(jnp.int32, (tm, vh), 1).astype(f32)
    target = cells + c_idx * kp1                                         # hot column per cell

    jj = lax.broadcasted_iota(jnp.int32, (vh, d), 1)
    cc = lax.broadcasted_iota(jnp.int32, (vh, d), 0)
    sel = ((jj >= cc * kp1) & (jj < (cc + 1) * kp1)).astype(f32)         # (VH, D), one 1 per col

    tgt_col = jnp.dot(target, sel, preferred_element_type=f32,
                      precision=lax.Precision.HIGHEST)                   # (tm, D), exact ints
    col = lax.broadcasted_iota(jnp.int32, (tm, d), 1).astype(f32)
    x = (tgt_col == col).astype(bf16)                                    # one-hot, exact in bf16

    def lrelu(v):  # F.leaky_relu(negative_slope=0.2); elementwise math stays f32
        return jnp.where(v >= 0, v, 0.2 * v)

    # 4 MXU matmuls: bf16 operands, f32 accumulation; bias add in f32.
    h = lrelu(jnp.dot(x, w_ref[0], preferred_element_type=f32))                          # layer_in
    h = lrelu(jnp.dot(h.astype(bf16), w_ref[1], preferred_element_type=f32)
              + bias_ref[0:1, :])                                                        # layer1
    h = lrelu(jnp.dot(h.astype(bf16), w_ref[2], preferred_element_type=f32)
              + bias_ref[1:2, :])                                                        # layer2
    h = lrelu(jnp.dot(h.astype(bf16), w_ref[3], preferred_element_type=f32)
              + bias_ref[2:3, :])                                                        # layer3

    # layer_out (D -> 1): VPU multiply + lane reduction, not an N=1 MXU matvec.
    z = jnp.sum(h * bias_ref[3:4, :], axis=-1, keepdims=True) + bout_ref[0, 0]           # (tm, 1)

    # Narrow (tm, 1) store: 4 bytes/row of output HBM traffic instead of 512.
    o_ref[...] = jax.nn.sigmoid(z) * 10.0


def simple_linear_forward(dots_kind_matrix_3d, params, num_kind):
    """Forward of simple_linear_layer.

    dots_kind_matrix_3d: (V, H, B) int32, values in [0, num_kind].
    params: (w_stack (4,D,D) bf16 in (in,out) layout,
             bias_stack (4,D) f32 = [b1; b2; b3; wout_row],
             bout (1,1) f32).
    Returns (B, 1) float32.
    """
    v, hdim, b = dots_kind_matrix_3d.shape
    vh = (v - 2) * hdim
    d = vh * (num_kind + 1)
    w_stack, bias_stack, bout = params
    assert w_stack.shape == (4, d, d) and bias_stack.shape == (4, d)

    # Row tile: big enough to keep the MXU cadence busy (<=256), multiple of 32 so
    # int8 cells tiles stay sublane-aligned even when the block isn't full-array.
    tm = min(256, ((b + 31) // 32) * 32)
    b_pad = ((b + tm - 1) // tm) * tm
    n_tiles = b_pad // tm

    # Tiny int32 glue (one fused XLA op over (V-2)*H*B ints); the f32 one-hot is
    # built inside the kernel.  int8 cells: 4x less per-row input DMA.
    # TODO(synk): absorb this relayout into the kernel once in-kernel transposes of
    # tiny odd-shaped int tiles lower robustly; today it is (V-2)*H*B int elements.
    cells = jnp.transpose(dots_kind_matrix_3d[: v - 2], (2, 0, 1)).reshape(b, vh)
    cells = jnp.pad(cells, ((0, b_pad - b), (0, 0))).astype(jnp.int8)

    out_pad = pl.pallas_call(
        fused_mlp_kernel,
        out_shape=jax.ShapeDtypeStruct((b_pad, 1), jnp.float32),
        grid=(n_tiles,),
        in_specs=[
            pl.BlockSpec((tm, vh), lambda i: (i, 0)),            # per-tile board cells (int8)
            pl.BlockSpec((4, d, d), lambda i: (0, 0, 0)),        # bf16 weight stack, resident
            pl.BlockSpec((4, d), lambda i: (0, 0)),              # biases + wout row, resident
            pl.BlockSpec(memory_space=pltpu.MemorySpace.SMEM),   # bout scalar in SMEM
        ],
        out_specs=pl.BlockSpec((tm, 1), lambda i: (i, 0)),
        compiler_params=pltpu.CompilerParams(
            dimension_semantics=("parallel",)),                  # use both v7x TensorCores
    )(cells, w_stack, bias_stack, bout)

    return out_pad[:b]


def init_params(key, d):
    """nn.init.normal(weight, std=0.04) / normal(bias, std=0.03).
    DxD weights stored as (in, out), stacked into one (4, D, D) bf16 array (one DMA,
    half the bytes); b1/b2/b3/wout_row stacked into one (4, D) f32 array."""
    ks = jax.random.split(key, 6)
    w_std, b_std = 0.04, 0.03
    w_stack = (jax.random.normal(ks[0], (4, d, d), jnp.float32) * w_std).astype(jnp.bfloat16)
    b1   = jax.random.normal(ks[1], (1, d), jnp.float32) * b_std
    b2   = jax.random.normal(ks[2], (1, d), jnp.float32) * b_std
    b3   = jax.random.normal(ks[3], (1, d), jnp.float32) * b_std
    wout = jax.random.normal(ks[4], (1, d), jnp.float32) * w_std
    bias_stack = jnp.concatenate([b1, b2, b3, wout], axis=0).astype(jnp.float32)
    bout = (jax.random.normal(ks[5], (1, 1), jnp.float32) * b_std).astype(jnp.float32)
    return (w_stack, bias_stack, bout)


def reference_forward(dots, params, num_kind):
    """Pure-JAX f32 reference mirroring the PyTorch forward (weights upcast from bf16)."""
    w_stack, bias_stack, bout = params
    w = w_stack.astype(jnp.float32)
    dd = jnp.transpose(dots[:-2], (2, 0, 1))
    onehot = (dd[..., None] == jnp.arange(num_kind + 1, dtype=dd.dtype)).astype(jnp.float32)
    x = onehot.reshape(dd.shape[0], -1)
    lrelu = lambda v: jnp.where(v >= 0, v, 0.2 * v)
    h = lrelu(x @ w[0])
    h = lrelu(h @ w[1] + bias_stack[0:1])
    h = lrelu(h @ w[2] + bias_stack[1:2])
    h = lrelu(h @ w[3] + bias_stack[2:3])
    z = jnp.sum(h * bias_stack[3:4], axis=-1, keepdims=True) + bout[0, 0]
    return jax.nn.sigmoid(z) * 10.0


if __name__ == "__main__":
    # Small synthetic "env": num_vertical=6, num_horizontal=4, num_kind=3, batch=2
    NUM_VERTICAL, NUM_HORIZONTAL, NUM_KIND, BATCH = 6, 4, 3, 2
    D = (NUM_VERTICAL - 2) * NUM_HORIZONTAL * (NUM_KIND + 1)   # linear_input_size = 64

    key = jax.random.PRNGKey(0)
    k_dots, k_params = jax.random.split(key)

    dots = jax.random.randint(k_dots, (NUM_VERTICAL, NUM_HORIZONTAL, BATCH),
                              0, NUM_KIND + 1, dtype=jnp.int32)
    params = init_params(k_params, D)

    fwd = jax.jit(simple_linear_forward, static_argnums=2)
    out = fwd(dots, params, NUM_KIND)
    jax.block_until_ready(out)

    ref = reference_forward(dots, params, NUM_KIND)
    assert out.shape == (BATCH, 1)
    assert bool(jnp.all(jnp.isfinite(out)))
    assert bool(jnp.allclose(out, ref, atol=2e-2, rtol=0.0))
    print("KERNEL_OK")
</pallas_src>

<mosaic_0001>
module attributes {stable_mosaic.version = 11 : i64} {
  func.func @fused_mlp_kernel(%arg0: i32, %arg1: memref<32x16xi8, #tpu.memory_space<vmem>>, %arg2: memref<4x64x64xbf16, #tpu.memory_space<vmem>>, %arg3: memref<4x64xf32, #tpu.memory_space<vmem>>, %arg4: memref<1x1xf32, #tpu.memory_space<smem>>, %arg5: memref<32x1xf32, #tpu.memory_space<vmem>>) attributes {dimension_semantics = [#tpu.dimension_semantics<parallel>], iteration_bounds = array<i64: 1>, scalar_prefetch = 0 : i64, scratch_operands = 0 : i64, tpu.core_type = #tpu.core_type<tc>, window_params = [{transform_indices = @transform_0, window_bounds = array<i64: 32, 16>}, {pipeline_mode = #tpu.pipeline_mode<synchronous>, transform_indices = @transform_1, window_bounds = array<i64: 4, 64, 64>}, {pipeline_mode = #tpu.pipeline_mode<synchronous>, transform_indices = @transform_2, window_bounds = array<i64: 4, 64>}, {transform_indices = @transform_3, window_bounds = array<i64: 1, 1>}, {transform_indices = @transform_4, window_bounds = array<i64: 32, 1>}]} {
    %c0 = arith.constant 0 : index
    %c0_0 = arith.constant 0 : index
    %0 = vector.load %arg1[%c0, %c0_0] : memref<32x16xi8, #tpu.memory_space<vmem>>, vector<32x16xi8>
    %1 = arith.sitofp %0 : vector<32x16xi8> to vector<32x16xf32>
    %2 = tpu.iota {dimensions = array<i32: 1>} : vector<32x16xi32>
    %3 = arith.sitofp %2 : vector<32x16xi32> to vector<32x16xf32>
    %cst = arith.constant 4.000000e+00 : f32
    %4 = vector.broadcast %cst : f32 to vector<32x16xf32>
    %5 = arith.mulf %3, %4 : vector<32x16xf32>
    %6 = arith.addf %1, %5 : vector<32x16xf32>
    %7 = tpu.iota {dimensions = array<i32: 1>} : vector<16x64xi32>
    %8 = tpu.iota {dimensions = array<i32: 0>} : vector<16x64xi32>
    %c4_i32 = arith.constant 4 : i32
    %9 = vector.broadcast %c4_i32 : i32 to vector<16x64xi32>
    %10 = arith.muli %8, %9 : vector<16x64xi32>
    %11 = arith.cmpi sge, %7, %10 : vector<16x64xi32>
    %c1_i32 = arith.constant 1 : i32
    %12 = vector.broadcast %c1_i32 : i32 to vector<16x64xi32>
    %13 = arith.addi %8, %12 : vector<16x64xi32>
    %c4_i32_1 = arith.constant 4 : i32
    %14 = vector.broadcast %c4_i32_1 : i32 to vector<16x64xi32>
    %15 = arith.muli %13, %14 : vector<16x64xi32>
    %16 = arith.cmpi slt, %7, %15 : vector<16x64xi32>
    %17 = arith.andi %11, %16 : vector<16x64xi1>
    %18 = arith.extui %17 : vector<16x64xi1> to vector<16x64xi32>
    %19 = arith.sitofp %18 : vector<16x64xi32> to vector<16x64xf32>
    %cst_2 = arith.constant dense<0.000000e+00> : vector<32x64xf32>
    %20 = tpu.matmul %6, %19, %cst_2 {dimension_numbers = #tpu.dot_dimension_numbers<[1], [0], [0], [1], [0, 0, 1, 1], [], []>, precision = #tpu.contract_precision<fp32>} : vector<32x16xf32>, vector<16x64xf32>, vector<32x64xf32> -> vector<32x64xf32>
    %21 = tpu.iota {dimensions = array<i32: 1>} : vector<32x64xi32>
    %22 = arith.sitofp %21 : vector<32x64xi32> to vector<32x64xf32>
    %23 = arith.cmpf oeq, %20, %22 : vector<32x64xf32>
    %24 = arith.extui %23 : vector<32x64xi1> to vector<32x64xi32>
    %25 = arith.sitofp %24 : vector<32x64xi32> to vector<32x64xf32>
    %26 = arith.truncf %25 : vector<32x64xf32> to vector<32x64xbf16>
    %c0_3 = arith.constant 0 : index
    %c0_4 = arith.constant 0 : index
    %c0_5 = arith.constant 0 : index
    %27 = vector.load %arg2[%c0_3, %c0_4, %c0_5] : memref<4x64x64xbf16, #tpu.memory_space<vmem>>, vector<1x64x64xbf16>
    %28 = vector.shape_cast %27 : vector<1x64x64xbf16> to vector<64x64xbf16>
    %cst_6 = arith.constant dense<0.000000e+00> : vector<32x64xf32>
    %29 = tpu.matmul %26, %28, %cst_6 {dimension_numbers = #tpu.dot_dimension_numbers<[1], [0], [0], [1], [0, 0, 1, 1], [], []>} : vector<32x64xbf16>, vector<64x64xbf16>, vector<32x64xf32> -> vector<32x64xf32>
    %cst_7 = arith.constant 0.000000e+00 : f32
    %30 = vector.broadcast %cst_7 : f32 to vector<32x64xf32>
    %31 = arith.cmpf oge, %29, %30 : vector<32x64xf32>
    %cst_8 = arith.constant 2.000000e-01 : f32
    %32 = vector.broadcast %cst_8 : f32 to vector<32x64xf32>
    %33 = arith.mulf %32, %29 : vector<32x64xf32>
    %34 = arith.select %31, %29, %33 : vector<32x64xi1>, vector<32x64xf32>
    %35 = arith.truncf %34 : vector<32x64xf32> to vector<32x64xbf16>
    %c1 = arith.constant 1 : index
    %c0_9 = arith.constant 0 : index
    %c0_10 = arith.constant 0 : index
    %36 = vector.load %arg2[%c1, %c0_9, %c0_10] : memref<4x64x64xbf16, #tpu.memory_space<vmem>>, vector<1x64x64xbf16>
    %37 = vector.shape_cast %36 : vector<1x64x64xbf16> to vector<64x64xbf16>
    %cst_11 = arith.constant dense<0.000000e+00> : vector<32x64xf32>
    %38 = tpu.matmul %35, %37, %cst_11 {dimension_numbers = #tpu.dot_dimension_numbers<[1], [0], [0], [1], [0, 0, 1, 1], [], []>} : vector<32x64xbf16>, vector<64x64xbf16>, vector<32x64xf32> -> vector<32x64xf32>
    %c0_12 = arith.constant 0 : index
    %c0_13 = arith.constant 0 : index
    %39 = vector.load %arg3[%c0_12, %c0_13] : memref<4x64xf32, #tpu.memory_space<vmem>>, vector<1x64xf32>
    %40 = vector.broadcast %39 : vector<1x64xf32> to vector<32x64xf32>
    %41 = arith.addf %38, %40 : vector<32x64xf32>
    %cst_14 = arith.constant 0.000000e+00 : f32
    %42 = vector.broadcast %cst_14 : f32 to vector<32x64xf32>
    %43 = arith.cmpf oge, %41, %42 : vector<32x64xf32>
    %cst_15 = arith.constant 2.000000e-01 : f32
    %44 = vector.broadcast %cst_15 : f32 to vector<32x64xf32>
    %45 = arith.mulf %44, %41 : vector<32x64xf32>
    %46 = arith.select %43, %41, %45 : vector<32x64xi1>, vector<32x64xf32>
    %47 = arith.truncf %46 : vector<32x64xf32> to vector<32x64xbf16>
    %c2 = arith.constant 2 : index
    %c0_16 = arith.constant 0 : index
    %c0_17 = arith.constant 0 : index
    %48 = vector.load %arg2[%c2, %c0_16, %c0_17] : memref<4x64x64xbf16, #tpu.memory_space<vmem>>, vector<1x64x64xbf16>
    %49 = vector.shape_cast %48 : vector<1x64x64xbf16> to vector<64x64xbf16>
    %cst_18 = arith.constant dense<0.000000e+00> : vector<32x64xf32>
    %50 = tpu.matmul %47, %49, %cst_18 {dimension_numbers = #tpu.dot_dimension_numbers<[1], [0], [0], [1], [0, 0, 1, 1], [], []>} : vector<32x64xbf16>, vector<64x64xbf16>, vector<32x64xf32> -> vector<32x64xf32>
    %c1_19 = arith.constant 1 : index
    %c0_20 = arith.constant 0 : index
    %51 = vector.load %arg3[%c1_19, %c0_20] : memref<4x64xf32, #tpu.memory_space<vmem>>, vector<1x64xf32>
    %52 = vector.broadcast %51 : vector<1x64xf32> to vector<32x64xf32>
    %53 = arith.addf %50, %52 : vector<32x64xf32>
    %cst_21 = arith.constant 0.000000e+00 : f32
    %54 = vector.broadcast %cst_21 : f32 to vector<32x64xf32>
    %55 = arith.cmpf oge, %53, %54 : vector<32x64xf32>
    %cst_22 = arith.constant 2.000000e-01 : f32
    %56 = vector.broadcast %cst_22 : f32 to vector<32x64xf32>
    %57 = arith.mulf %56, %53 : vector<32x64xf32>
    %58 = arith.select %55, %53, %57 : vector<32x64xi1>, vector<32x64xf32>
    %59 = arith.truncf %58 : vector<32x64xf32> to vector<32x64xbf16>
    %c3 = arith.constant 3 : index
    %c0_23 = arith.constant 0 : index
    %c0_24 = arith.constant 0 : index
    %60 = vector.load %arg2[%c3, %c0_23, %c0_24] : memref<4x64x64xbf16, #tpu.memory_space<vmem>>, vector<1x64x64xbf16>
    %61 = vector.shape_cast %60 : vector<1x64x64xbf16> to vector<64x64xbf16>
    %cst_25 = arith.constant dense<0.000000e+00> : vector<32x64xf32>
    %62 = tpu.matmul %59, %61, %cst_25 {dimension_numbers = #tpu.dot_dimension_numbers<[1], [0], [0], [1], [0, 0, 1, 1], [], []>} : vector<32x64xbf16>, vector<64x64xbf16>, vector<32x64xf32> -> vector<32x64xf32>
    %c2_26 = arith.constant 2 : index
    %c0_27 = arith.constant 0 : index
    %63 = vector.load %arg3[%c2_26, %c0_27] : memref<4x64xf32, #tpu.memory_space<vmem>>, vector<1x64xf32>
    %64 = vector.broadcast %63 : vector<1x64xf32> to vector<32x64xf32>
    %65 = arith.addf %62, %64 : vector<32x64xf32>
    %cst_28 = arith.constant 0.000000e+00 : f32
    %66 = vector.broadcast %cst_28 : f32 to vector<32x64xf32>
    %67 = arith.cmpf oge, %65, %66 : vector<32x64xf32>
    %cst_29 = arith.constant 2.000000e-01 : f32
    %68 = vector.broadcast %cst_29 : f32 to vector<32x64xf32>
    %69 = arith.mulf %68, %65 : vector<32x64xf32>
    %70 = arith.select %67, %65, %69 : vector<32x64xi1>, vector<32x64xf32>
    %c3_30 = arith.constant 3 : index
    %c0_31 = arith.constant 0 : index
    %71 = vector.load %arg3[%c3_30, %c0_31] : memref<4x64xf32, #tpu.memory_space<vmem>>, vector<1x64xf32>
    %72 = vector.broadcast %71 : vector<1x64xf32> to vector<32x64xf32>
    %73 = arith.mulf %70, %72 : vector<32x64xf32>
    %cst_32 = arith.constant dense<0.000000e+00> : vector<32xf32>
    %74 = vector.multi_reduction <add>, %73, %cst_32 [1] : vector<32x64xf32> to vector<32xf32>
    %75 = vector.shape_cast %74 : vector<32xf32> to vector<32x1xf32>
    %c0_33 = arith.constant 0 : index
    %c0_34 = arith.constant 0 : index
    %76 = memref.load %arg4[%c0_33, %c0_34] : memref<1x1xf32, #tpu.memory_space<smem>>
    %77 = vector.broadcast %76 : f32 to vector<32x1xf32>
    %78 = arith.addf %75, %77 : vector<32x1xf32>
    %79 = arith.negf %78 : vector<32x1xf32>
    %80 = math.exp %79 : vector<32x1xf32>
    %cst_35 = arith.constant 1.000000e+00 : f32
    %81 = vector.broadcast %cst_35 : f32 to vector<32x1xf32>
    %82 = arith.addf %81, %80 : vector<32x1xf32>
    %83 = arith.divf %81, %82 : vector<32x1xf32>
    %cst_36 = arith.constant 1.000000e+01 : f32
    %84 = vector.broadcast %cst_36 : f32 to vector<32x1xf32>
    %85 = arith.mulf %83, %84 : vector<32x1xf32>
    %c0_37 = arith.constant 0 : index
    %c0_38 = arith.constant 0 : index
    %86 = vector.load %arg5[%c0_37, %c0_38] : memref<32x1xf32, #tpu.memory_space<vmem>>, vector<32x1xf32>
    tpu.vector_store %arg5[%c0_37, %c0_38], %85 {strides = array<i32>} : memref<32x1xf32, #tpu.memory_space<vmem>>, vector<32x1xf32>,
    return
  }
  func.func @transform_0(%arg0: i32) -> (i32, i32) {
    %c0_i32 = arith.constant 0 : i32
    %c0_i32_0 = arith.constant 0 : i32
    return %arg0, %c0_i32 : i32, i32
  }
  func.func @transform_1(%arg0: i32) -> (i32, i32, i32) {
    %c0_i32 = arith.constant 0 : i32
    %c0_i32_0 = arith.constant 0 : i32
    %c0_i32_1 = arith.constant 0 : i32
    %c0_i32_2 = arith.constant 0 : i32
    return %c0_i32, %c0_i32_0, %c0_i32_1 : i32, i32, i32
  }
  func.func @transform_2(%arg0: i32) -> (i32, i32) {
    %c0_i32 = arith.constant 0 : i32
    %c0_i32_0 = arith.constant 0 : i32
    %c0_i32_1 = arith.constant 0 : i32
    return %c0_i32, %c0_i32_0 : i32, i32
  }
  func.func @transform_3(%arg0: i32) -> (i32, i32) {
    %c0_i32 = arith.constant 0 : i32
    %c0_i32_0 = arith.constant 0 : i32
    %c0_i32_1 = arith.constant 0 : i32
    return %c0_i32, %c0_i32_0 : i32, i32
  }
  func.func @transform_4(%arg0: i32) -> (i32, i32) {
    %c0_i32 = arith.constant 0 : i32
    %c0_i32_0 = arith.constant 0 : i32
    return %arg0, %c0_i32 : i32, i32
  }
}

</mosaic_0001>

<llo_original>
// kernel: simple_linear_forward.1
$region0: #{simple_linear_forward.1}
  #allocation0 [shape = 'u32[]', space=smem, size = 0x4, offset = 0x4, fixed_abs, tag = 'smem constant byte address 0x4 - core index']
  #allocation1 [shape = 'u32[72,128]{1,0:T(1,128)}', space=vmem, size = 0x9000, scoped, tag = 'internal scratch']
  #allocation2 [shape = 'f32[1,1]{1,0:T(1,128)S(6)}', space=smem, size = 0x200, scoped, tag = 'scoped memory for simple_linear_forward.1']
  %s0 = inlined_call_operand.vmem [shape: s8[32,16], index: 0, kind: input, shape index: {}]
  %s1 = inlined_call_operand.hbm [shape: bf16[4,64,64], index: 1, kind: input, shape index: {}]
  %s2 = inlined_call_operand.vmem [shape: f32[4,64], index: 2, kind: input, shape index: {}]
  %s3 = inlined_call_operand.<no memory space> [shape: f32[1,1], index: 3, kind: input, shape index: {}]
  %s4 = inlined_call_operand.vmem [shape: f32[32,1], index: 4, kind: output, shape index: {}]
  %s5 = sld [smem:[#allocation0]]
  $region30: #{simple_linear_forward.1} parent=0
    _
  %s7 = ssub.s32 1, %s5
  %s8 = scalar_select 0, %s7, %s5
  %9 = sst [smem:[#allocation2]] %s3
  $region1: #{simple_linear_forward.1} parent=0
    #allocation3 [shape = 'u8[65536]{0}', space=vmem, size = 0x10000, scoped, tag = 'input window, operand 1, single buffered']
    #allocation4 [shape = 's32[1]{0}', space=sflag, size = 0x4, scoped, tag = 'scoped memory for simple_linear_forward.1']
    %10 = vsyncpa [#allocation4], 0
    // Predicated region
    $region2: #{simple_linear_forward.1} parent=1 // pred_check
      _
    $region3: #{simple_linear_forward.1} parent=1 // pred_check_branch
      %12 = sbr.rel (0) target = $region5
    $region4: #{simple_linear_forward.1} parent=1 // pred_region
      _
    $region5: #{simple_linear_forward.1} parent=1 // pred_fallthru
      _
    // Predicated region
    $region6: #{simple_linear_forward.1} parent=1 // pred_check
      _
    $region7: #{simple_linear_forward.1} parent=1 // pred_check_branch
      %14 = sbr.rel (0) target = $region9
    $region8: #{simple_linear_forward.1} parent=1 // pred_region
      %16 = vsyncadd [#allocation4], 0
      %s17 = sshll.u32 %s1, 4
      %s18 = int_to_ptr.hbm [resolvable:$true] %s17
      %s19 = sshll.u32 [#allocation3], 4
      %s20 = int_to_ptr.vmem [resolvable:$true] %s19
      %25 = dma.hbm_to_vmem [thread:$0]  %s18, 2048, %s20, [#allocation4], 64, 64, 4
    $region9: #{simple_linear_forward.1} parent=1 // pred_fallthru
      _
    // Predicated region
    $region10: #{simple_linear_forward.1} parent=1 // pred_check
      _
    $region11: #{simple_linear_forward.1} parent=1 // pred_check_branch
      %27 = sbr.rel (0) target = $region13
    $region12: #{simple_linear_forward.1} parent=1 // pred_region
      _
    $region13: #{simple_linear_forward.1} parent=1 // pred_fallthru
      _
    // Predicated region
    $region14: #{simple_linear_forward.1} parent=1 // pred_check
      _
    $region15: #{simple_linear_forward.1} parent=1 // pred_check_branch
      %29 = sbr.rel (0) target = $region17
    $region16: #{simple_linear_forward.1} parent=1 // pred_region
      _
    $region17: #{simple_linear_forward.1} parent=1 // pred_fallthru
      _
    // Predicated region
    $region18: #{simple_linear_forward.1} parent=1 // pred_check
      _
    $region19: #{simple_linear_forward.1} parent=1 // pred_check_branch
      %31 = sbr.rel (0) target = $region21
    $region20: #{simple_linear_forward.1} parent=1 // pred_region
      %33 = dma.done [#allocation4], 2048
    $region21: #{simple_linear_forward.1} parent=1 // pred_fallthru
      _
    %v35 = vld [vmem:[%s0] sm:$0xff]
    %v36 = vunpack.c.0.s8 %v35
    %v37 = vunpack.c.1.s8 %v35
    %v38 = vunpack.c.2.s8 %v35
    %v39 = vunpack.c.3.s8 %v35
    %v40 = vcvt.s32.f32 %v36
    %v41 = vcvt.s32.f32 %v37
    %v42 = vcvt.s32.f32 %v38
    %v43 = vcvt.s32.f32 %v39
    %v44 = vlaneseq
    %v45 = vand.u32 %v44, 127
    %v46 = vcvt.s32.f32 %v45
    %v47 = vmul.f32 %v46, 4.0
    %v48 = vadd.f32 %v40, %v47
    %v49 = vadd.f32 %v41, %v47
    %v50 = vadd.f32 %v42, %v47
    %v51 = vadd.f32 %v43, %v47
    %v52 = vlaneseq
    %v53 = vshrl.u32 %v52, 7
    %v54 = vadd.s32 %v53, 8
    %v55 = vmul.u32 %v53, 4
    %v56 = vmul.u32 %v54, 4
    %vm57 = vcmp.ge.s32.totalorder %v45, %v55
    %vm58 = vcmp.ge.s32.totalorder %v45, %v56
    %v59 = vadd.s32 %v53, 1
    %v60 = vadd.s32 %v54, 1
    %v61 = vmul.u32 %v59, 4
    %v62 = vmul.u32 %v60, 4
    %vm63 = vcmp.lt.s32.totalorder %v45, %v61
    %vm64 = vcmp.lt.s32.totalorder %v45, %v62
    %vm65 = vmand %vm57, %vm63
    %vm66 = vmand %vm58, %vm64
    %v67 = vsel %vm65, 1, 0
    %v68 = vsel %vm66, 1, 0
    %v69 = vcvt.s32.f32 %v67
    %v70 = vcvt.s32.f32 %v68
    %vm71 = vcmask 130048
    %v73 = vsel %vm71, %v48, 0
    %v76 = vsel %vm71, %v49, 0
    %v79 = vsel %vm71, %v50, 0
    %v82 = vsel %vm71, %v51, 0
    %84 = vmatpush.msra.mxu0 0.0
    %85 = vmatpush.msra.mxu0 0.0
    %86 = vmatpush.msra.mxu0 0.0
    %87 = vmatpush.msra.mxu0 0.0
    %88 = vmatpush.msra.mxu0 0.0
    %89 = vmatpush.msra.mxu0 0.0
    %90 = vmatpush.msra.mxu0 0.0
    %91 = vmatpush.msra.mxu0 0.0
    %92 = vmatpush.msra.mxu0 0.0
    %93 = vmatpush.msra.mxu0 0.0
    %94 = vmatpush.msra.mxu0 0.0
    %95 = vmatpush.msra.mxu0 0.0
    %96 = vmatpush.msra.mxu0 0.0
    %97 = vmatpush.msra.mxu0 0.0
    %v98 = vand.u32 %v70, 4294901760
    %99 = vmatpush.msra.mxu0 %v98
    %v100 = vand.u32 %v69, 4294901760
    %101 = vmatpush.msra.mxu0 %v100
    %v102 = vand.u32 %v73, 4294901760
    %v103 = vsub.f32 %v73, %v102
    %v104 = vand.u32 %v103, 4294901760
    %v105 = vsub.f32 %v103, %v104
    %v106 = vand.u32 %v105, 4294901760
    %107 = vmatmul.f32.gmra.mxu0 %v106
    %v108 = vpop.f32.mrf.mxu0
    %v109 = vadd.f32 0.0, %v108
    %v110 = vand.u32 %v76, 4294901760
    %v111 = vsub.f32 %v76, %v110
    %v112 = vand.u32 %v111, 4294901760
    %v113 = vsub.f32 %v111, %v112
    %v114 = vand.u32 %v113, 4294901760
    %115 = vmatmul.f32.gmra.mxu0 %v114
    %v116 = vpop.f32.mrf.mxu0
    %v117 = vadd.f32 0.0, %v116
    %v118 = vand.u32 %v79, 4294901760
    %v119 = vsub.f32 %v79, %v118
    %v120 = vand.u32 %v119, 4294901760
    %v121 = vsub.f32 %v119, %v120
    %v122 = vand.u32 %v121, 4294901760
    %123 = vmatmul.f32.gmra.mxu0 %v122
    %v124 = vpop.f32.mrf.mxu0
    %v125 = vadd.f32 0.0, %v124
    %v126 = vand.u32 %v82, 4294901760
    %v127 = vsub.f32 %v82, %v126
    %v128 = vand.u32 %v127, 4294901760
    %v129 = vsub.f32 %v127, %v128
    %v130 = vand.u32 %v129, 4294901760
    %131 = vmatmul.f32.gmra.mxu0 %v130
    %v132 = vpop.f32.mrf.mxu0
    %v133 = vadd.f32 0.0, %v132
    %134 = vdwg.mxu0
    %135 = vmatpush.msra.mxu0 0.0
    %136 = vmatpush.msra.mxu0 0.0
    %137 = vmatpush.msra.mxu0 0.0
    %138 = vmatpush.msra.mxu0 0.0
    %139 = vmatpush.msra.mxu0 0.0
    %140 = vmatpush.msra.mxu0 0.0
    %141 = vmatpush.msra.mxu0 0.0
    %142 = vmatpush.msra.mxu0 0.0
    %143 = vmatpush.msra.mxu0 0.0
    %144 = vmatpush.msra.mxu0 0.0
    %145 = vmatpush.msra.mxu0 0.0
    %146 = vmatpush.msra.mxu0 0.0
    %147 = vmatpush.msra.mxu0 0.0
    %148 = vmatpush.msra.mxu0 0.0
    %v149 = vand.u32 %v70, 4294901760
    %v150 = vsub.f32 %v70, %v149
    %v151 = vand.u32 %v150, 4294901760
    %v152 = vsub.f32 %v150, %v151
    %v153 = vand.u32 %v152, 4294901760
    %154 = vmatpush.msra.mxu0 %v153
    %v155 = vand.u32 %v69, 4294901760
    %v156 = vsub.f32 %v69, %v155
    %v157 = vand.u32 %v156, 4294901760
    %v158 = vsub.f32 %v156, %v157
    %v159 = vand.u32 %v158, 4294901760
    %160 = vmatpush.msra.mxu0 %v159
    %v161 = vand.u32 %v73, 4294901760
    %162 = vmatmul.f32.gmra.mxu0 %v161
    %v163 = vpop.f32.mrf.mxu0
    %v164 = vadd.f32 %v109, %v163
    %v165 = vand.u32 %v76, 4294901760
    %166 = vmatmul.f32.gmra.mxu0 %v165
    %v167 = vpop.f32.mrf.mxu0
    %v168 = vadd.f32 %v117, %v167
    %v169 = vand.u32 %v79, 4294901760
    %170 = vmatmul.f32.gmra.mxu0 %v169
    %v171 = vpop.f32.mrf.mxu0
    %v172 = vadd.f32 %v125, %v171
    %v173 = vand.u32 %v82, 4294901760
    %174 = vmatmul.f32.gmra.mxu0 %v173
    %v175 = vpop.f32.mrf.mxu0
    %v176 = vadd.f32 %v133, %v175
    %177 = vdwg.mxu0
    %178 = vmatpush.msra.mxu0 0.0
    %179 = vmatpush.msra.mxu0 0.0
    %180 = vmatpush.msra.mxu0 0.0
    %181 = vmatpush.msra.mxu0 0.0
    %182 = vmatpush.msra.mxu0 0.0
    %183 = vmatpush.msra.mxu0 0.0
    %184 = vmatpush.msra.mxu0 0.0
    %185 = vmatpush.msra.mxu0 0.0
    %186 = vmatpush.msra.mxu0 0.0
    %187 = vmatpush.msra.mxu0 0.0
    %188 = vmatpush.msra.mxu0 0.0
    %189 = vmatpush.msra.mxu0 0.0
    %190 = vmatpush.msra.mxu0 0.0
    %191 = vmatpush.msra.mxu0 0.0
    %v192 = vand.u32 %v70, 4294901760
    %v193 = vsub.f32 %v70, %v192
    %194 = vmatpush.msra.mxu0 %v193
    %v195 = vand.u32 %v69, 4294901760
    %v196 = vsub.f32 %v69, %v195
    %197 = vmatpush.msra.mxu0 %v196
    %v198 = vand.u32 %v73, 4294901760
    %v199 = vsub.f32 %v73, %v198
    %200 = vmatmul.f32.gmra.mxu0 %v199
    %v201 = vpop.f32.mrf.mxu0
    %v202 = vadd.f32 %v164, %v201
    %v203 = vand.u32 %v76, 4294901760
    %v204 = vsub.f32 %v76, %v203
    %205 = vmatmul.f32.gmra.mxu0 %v204
    %v206 = vpop.f32.mrf.mxu0
    %v207 = vadd.f32 %v168, %v206
    %v208 = vand.u32 %v79, 4294901760
    %v209 = vsub.f32 %v79, %v208
    %210 = vmatmul.f32.gmra.mxu0 %v209
    %v211 = vpop.f32.mrf.mxu0
    %v212 = vadd.f32 %v172, %v211
    %v213 = vand.u32 %v82, 4294901760
    %v214 = vsub.f32 %v82, %v213
    %215 = vmatmul.f32.gmra.mxu0 %v214
    %v216 = vpop.f32.mrf.mxu0
    %v217 = vadd.f32 %v176, %v216
    %218 = vdwg.mxu0
    %219 = vmatpush.msra.mxu0 0.0
    %220 = vmatpush.msra.mxu0 0.0
    %221 = vmatpush.msra.mxu0 0.0
    %222 = vmatpush.msra.mxu0 0.0
    %223 = vmatpush.msra.mxu0 0.0
    %224 = vmatpush.msra.mxu0 0.0
    %225 = vmatpush.msra.mxu0 0.0
    %226 = vmatpush.msra.mxu0 0.0
    %227 = vmatpush.msra.mxu0 0.0
    %228 = vmatpush.msra.mxu0 0.0
    %229 = vmatpush.msra.mxu0 0.0
    %230 = vmatpush.msra.mxu0 0.0
    %231 = vmatpush.msra.mxu0 0.0
    %232 = vmatpush.msra.mxu0 0.0
    %v233 = vand.u32 %v70, 4294901760
    %234 = vmatpush.msra.mxu0 %v233
    %v235 = vand.u32 %v69, 4294901760
    %236 = vmatpush.msra.mxu0 %v235
    %v237 = vand.u32 %v73, 4294901760
    %v238 = vsub.f32 %v73, %v237
    %v239 = vand.u32 %v238, 4294901760
    %240 = vmatmul.f32.gmra.mxu0 %v239
    %v241 = vpop.f32.mrf.mxu0
    %v242 = vadd.f32 %v202, %v241
    %v243 = vand.u32 %v76, 4294901760
    %v244 = vsub.f32 %v76, %v243
    %v245 = vand.u32 %v244, 4294901760
    %246 = vmatmul.f32.gmra.mxu0 %v245
    %v247 = vpop.f32.mrf.mxu0
    %v248 = vadd.f32 %v207, %v247
    %v249 = vand.u32 %v79, 4294901760
    %v250 = vsub.f32 %v79, %v249
    %v251 = vand.u32 %v250, 4294901760
    %252 = vmatmul.f32.gmra.mxu0 %v251
    %v253 = vpop.f32.mrf.mxu0
    %v254 = vadd.f32 %v212, %v253
    %v255 = vand.u32 %v82, 4294901760
    %v256 = vsub.f32 %v82, %v255
    %v257 = vand.u32 %v256, 4294901760
    %258 = vmatmul.f32.gmra.mxu0 %v257
    %v259 = vpop.f32.mrf.mxu0
    %v260 = vadd.f32 %v217, %v259
    %261 = vdwg.mxu0
    %262 = vmatpush.msra.mxu0 0.0
    %263 = vmatpush.msra.mxu0 0.0
    %264 = vmatpush.msra.mxu0 0.0
    %265 = vmatpush.msra.mxu0 0.0
    %266 = vmatpush.msra.mxu0 0.0
    %267 = vmatpush.msra.mxu0 0.0
    %268 = vmatpush.msra.mxu0 0.0
    %269 = vmatpush.msra.mxu0 0.0
    %270 = vmatpush.msra.mxu0 0.0
    %271 = vmatpush.msra.mxu0 0.0
    %272 = vmatpush.msra.mxu0 0.0
    %273 = vmatpush.msra.mxu0 0.0
    %274 = vmatpush.msra.mxu0 0.0
    %275 = vmatpush.msra.mxu0 0.0
    %v276 = vand.u32 %v70, 4294901760
    %v277 = vsub.f32 %v70, %v276
    %v278 = vand.u32 %v277, 4294901760
    %279 = vmatpush.msra.mxu0 %v278
    %v280 = vand.u32 %v69, 4294901760
    %v281 = vsub.f32 %v69, %v280
    %v282 = vand.u32 %v281, 4294901760
    %283 = vmatpush.msra.mxu0 %v282
    %v284 = vand.u32 %v73, 4294901760
    %285 = vmatmul.f32.gmra.mxu0 %v284
    %v286 = vpop.f32.mrf.mxu0
    %v287 = vadd.f32 %v242, %v286
    %v288 = vand.u32 %v76, 4294901760
    %289 = vmatmul.f32.gmra.mxu0 %v288
    %v290 = vpop.f32.mrf.mxu0
    %v291 = vadd.f32 %v248, %v290
    %v292 = vand.u32 %v79, 4294901760
    %293 = vmatmul.f32.gmra.mxu0 %v292
    %v294 = vpop.f32.mrf.mxu0
    %v295 = vadd.f32 %v254, %v294
    %v296 = vand.u32 %v82, 4294901760
    %297 = vmatmul.f32.gmra.mxu0 %v296
    %v298 = vpop.f32.mrf.mxu0
    %v299 = vadd.f32 %v260, %v298
    %300 = vdwg.mxu0
    %301 = vmatpush.msra.mxu0 0.0
    %302 = vmatpush.msra.mxu0 0.0
    %303 = vmatpush.msra.mxu0 0.0
    %304 = vmatpush.msra.mxu0 0.0
    %305 = vmatpush.msra.mxu0 0.0
    %306 = vmatpush.msra.mxu0 0.0
    %307 = vmatpush.msra.mxu0 0.0
    %308 = vmatpush.msra.mxu0 0.0
    %309 = vmatpush.msra.mxu0 0.0
    %310 = vmatpush.msra.mxu0 0.0
    %311 = vmatpush.msra.mxu0 0.0
    %312 = vmatpush.msra.mxu0 0.0
    %313 = vmatpush.msra.mxu0 0.0
    %314 = vmatpush.msra.mxu0 0.0
    %v315 = vand.u32 %v70, 4294901760
    %316 = vmatpush.msra.mxu0 %v315
    %v317 = vand.u32 %v69, 4294901760
    %318 = vmatpush.msra.mxu0 %v317
    %v319 = vand.u32 %v73, 4294901760
    %320 = vmatmul.f32.gmra.mxu0 %v319
    %v321 = vpop.f32.mrf.mxu0
    %v322 = vadd.f32 %v287, %v321
    %v323 = vand.u32 %v76, 4294901760
    %324 = vmatmul.f32.gmra.mxu0 %v323
    %v325 = vpop.f32.mrf.mxu0
    %v326 = vadd.f32 %v291, %v325
    %v327 = vand.u32 %v79, 4294901760
    %328 = vmatmul.f32.gmra.mxu0 %v327
    %v329 = vpop.f32.mrf.mxu0
    %v330 = vadd.f32 %v295, %v329
    %v331 = vand.u32 %v82, 4294901760
    %332 = vmatmul.f32.gmra.mxu0 %v331
    %v333 = vpop.f32.mrf.mxu0
    %v334 = vadd.f32 %v299, %v333
    %335 = vdwg.mxu0
    %vm336 = vcmp.eq.f32.partialorder %v322, %v46
    %vm337 = vcmp.eq.f32.partialorder %v326, %v46
    %vm338 = vcmp.eq.f32.partialorder %v330, %v46
    %vm339 = vcmp.eq.f32.partialorder %v334, %v46
    %v340 = vsel %vm336, 1, 0
    %v341 = vsel %vm337, 1, 0
    %v342 = vsel %vm338, 1, 0
    %v343 = vsel %vm339, 1, 0
    %v344 = vcvt.s32.f32 %v340
    %v345 = vcvt.s32.f32 %v341
    %v346 = vcvt.s32.f32 %v342
    %v347 = vcvt.s32.f32 %v343
    %v348 = vpack.c.bf16 %v345, %v344
    %v349 = vpack.c.bf16 %v347, %v346
    %v350 = vld [vmem:[#allocation3] sm:$0xf]
    %v351 = vld [vmem:[#allocation3 + $0x4] sm:$0xf]
    %v352 = vld [vmem:[#allocation3 + $0x8] sm:$0xf]
    %v353 = vld [vmem:[#allocation3 + $0xc] sm:$0xf]
    %v354 = vld [vmem:[#allocation3 + $0x10] sm:$0xf]
    %v355 = vld [vmem:[#allocation3 + $0x14] sm:$0xf]
    %v356 = vld [vmem:[#allocation3 + $0x18] sm:$0xf]
    %v357 = vld [vmem:[#allocation3 + $0x1c] sm:$0xf]
    %v366 = vunpack.c.l.b16 %v350
    %v367 = vunpack.c.l.b16 %v351
    %v368 = vunpack.c.l.b16 %v352
    %v369 = vunpack.c.l.b16 %v353
    %v370 = vunpack.c.l.b16 %v354
    %v371 = vunpack.c.l.b16 %v355
    %v372 = vunpack.c.l.b16 %v356
    %v373 = vunpack.c.l.b16 %v357
    %v374 = vpack.c.b16 %v367, %v366
    %v375 = vpack.c.b16 %v369, %v368
    %v376 = vpack.c.b16 %v371, %v370
    %v377 = vpack.c.b16 %v373, %v372
    %vm382 = vcmask 523264
    %v384 = vsel %vm382, %v348, 0
    %v387 = vsel %vm382, %v349, 0
    %389 = vmatpush.bf16.msra.mxu0 0
    %390 = vmatpush.bf16.msra.mxu0 0
    %391 = vmatpush.bf16.msra.mxu0 0
    %392 = vmatpush.bf16.msra.mxu0 0
    %393 = vmatpush.bf16.msra.mxu0 %v377
    %394 = vmatpush.bf16.msra.mxu0 %v376
    %395 = vmatpush.bf16.msra.mxu0 %v375
    %396 = vmatpush.bf16.msra.mxu0 %v374
    %397 = vmatmul.bf16.gmra.mxu0 %v384
    %v398 = vpop.f32.mrf.mxu0
    %v399 = vadd.f32 0.0, %v398
    %v400 = vpop.f32.mrf.mxu0
    %v401 = vadd.f32 0.0, %v400
    %402 = vmatmul.bf16.gmra.mxu0 %v387
    %v403 = vpop.f32.mrf.mxu0
    %v404 = vadd.f32 0.0, %v403
    %v405 = vpop.f32.mrf.mxu0
    %v406 = vadd.f32 0.0, %v405
    %407 = vdwg.mxu0
    %vm408 = vcmp.ge.f32.partialorder %v399, 0.0
    %vm409 = vcmp.ge.f32.partialorder %v401, 0.0
    %vm410 = vcmp.ge.f32.partialorder %v404, 0.0
    %vm411 = vcmp.ge.f32.partialorder %v406, 0.0
    %v412 = vmul.f32 %v399, 0.2
    %v413 = vmul.f32 %v401, 0.2
    %v414 = vmul.f32 %v404, 0.2
    %v415 = vmul.f32 %v406, 0.2
    %v416 = vsel %vm408, %v399, %v412
    %v417 = vsel %vm409, %v401, %v413
    %v418 = vsel %vm410, %v404, %v414
    %v419 = vsel %vm411, %v406, %v415
    %v420 = vpack.c.bf16 %v417, %v416
    %v421 = vpack.c.bf16 %v419, %v418
    %s422 = scalar_lea.vmem [#allocation3], 32
    %v423 = vld [vmem:[%s422] sm:$0xf]
    %v424 = vld [vmem:[%s422 + $0x4] sm:$0xf]
    %v425 = vld [vmem:[%s422 + $0x8] sm:$0xf]
    %v426 = vld [vmem:[%s422 + $0xc] sm:$0xf]
    %v427 = vld [vmem:[%s422 + $0x10] sm:$0xf]
    %v428 = vld [vmem:[%s422 + $0x14] sm:$0xf]
    %v429 = vld [vmem:[%s422 + $0x18] sm:$0xf]
    %v430 = vld [vmem:[%s422 + $0x1c] sm:$0xf]
    %v431 = vld [vmem:[%s2] sm:$0x1]
    %v432 = vperm.slane %v431, 0
    %v441 = vunpack.c.l.b16 %v423
    %v442 = vunpack.c.l.b16 %v424
    %v443 = vunpack.c.l.b16 %v425
    %v444 = vunpack.c.l.b16 %v426
    %v445 = vunpack.c.l.b16 %v427
    %v446 = vunpack.c.l.b16 %v428
    %v447 = vunpack.c.l.b16 %v429
    %v448 = vunpack.c.l.b16 %v430
    %v449 = vpack.c.b16 %v442, %v441
    %v450 = vpack.c.b16 %v444, %v443
    %v451 = vpack.c.b16 %v446, %v445
    %v452 = vpack.c.b16 %v448, %v447
    %v458 = vsel %vm382, %v420, 0
    %v461 = vsel %vm382, %v421, 0
    %463 = vmatpush.bf16.msra.mxu0 0
    %464 = vmatpush.bf16.msra.mxu0 0
    %465 = vmatpush.bf16.msra.mxu0 0
    %466 = vmatpush.bf16.msra.mxu0 0
    %467 = vmatpush.bf16.msra.mxu0 %v452
    %468 = vmatpush.bf16.msra.mxu0 %v451
    %469 = vmatpush.bf16.msra.mxu0 %v450
    %470 = vmatpush.bf16.msra.mxu0 %v449
    %471 = vmatmul.bf16.gmra.mxu0 %v458
    %v472 = vpop.f32.mrf.mxu0
    %v473 = vadd.f32 %v432, %v472
    %v474 = vpop.f32.mrf.mxu0
    %v475 = vadd.f32 %v432, %v474
    %476 = vmatmul.bf16.gmra.mxu0 %v461
    %v477 = vpop.f32.mrf.mxu0
    %v478 = vadd.f32 %v432, %v477
    %v479 = vpop.f32.mrf.mxu0
    %v480 = vadd.f32 %v432, %v479
    %481 = vdwg.mxu0
    %vm482 = vcmp.ge.f32.partialorder %v473, 0.0
    %vm483 = vcmp.ge.f32.partialorder %v475, 0.0
    %vm484 = vcmp.ge.f32.partialorder %v478, 0.0
    %vm485 = vcmp.ge.f32.partialorder %v480, 0.0
    %v486 = vmul.f32 %v473, 0.2
    %v487 = vmul.f32 %v475, 0.2
    %v488 = vmul.f32 %v478, 0.2
    %v489 = vmul.f32 %v480, 0.2
    %v490 = vsel %vm482, %v473, %v486
    %v491 = vsel %vm483, %v475, %v487
    %v492 = vsel %vm484, %v478, %v488
    %v493 = vsel %vm485, %v480, %v489
    %v494 = vpack.c.bf16 %v491, %v490
    %v495 = vpack.c.bf16 %v493, %v492
    %s496 = scalar_lea.vmem [#allocation3], 64
    %v497 = vld [vmem:[%s496] sm:$0xf]
    %v498 = vld [vmem:[%s496 + $0x4] sm:$0xf]
    %v499 = vld [vmem:[%s496 + $0x8] sm:$0xf]
    %v500 = vld [vmem:[%s496 + $0xc] sm:$0xf]
    %v501 = vld [vmem:[%s496 + $0x10] sm:$0xf]
    %v502 = vld [vmem:[%s496 + $0x14] sm:$0xf]
    %v503 = vld [vmem:[%s496 + $0x18] sm:$0xf]
    %v504 = vld [vmem:[%s496 + $0x1c] sm:$0xf]
    %v505 = vld [vmem:[%s2 + $0x1] sm:$0x1]
    %v506 = vperm.slane %v505, 0
    %v515 = vunpack.c.l.b16 %v497
    %v516 = vunpack.c.l.b16 %v498
    %v517 = vunpack.c.l.b16 %v499
    %v518 = vunpack.c.l.b16 %v500
    %v519 = vunpack.c.l.b16 %v501
    %v520 = vunpack.c.l.b16 %v502
    %v521 = vunpack.c.l.b16 %v503
    %v522 = vunpack.c.l.b16 %v504
    %v523 = vpack.c.b16 %v516, %v515
    %v524 = vpack.c.b16 %v518, %v517
    %v525 = vpack.c.b16 %v520, %v519
    %v526 = vpack.c.b16 %v522, %v521
    %v532 = vsel %vm382, %v494, 0
    %v535 = vsel %vm382, %v495, 0
    %537 = vmatpush.bf16.msra.mxu0 0
    %538 = vmatpush.bf16.msra.mxu0 0
    %539 = vmatpush.bf16.msra.mxu0 0
    %540 = vmatpush.bf16.msra.mxu0 0
    %541 = vmatpush.bf16.msra.mxu0 %v526
    %542 = vmatpush.bf16.msra.mxu0 %v525
    %543 = vmatpush.bf16.msra.mxu0 %v524
    %544 = vmatpush.bf16.msra.mxu0 %v523
    %545 = vmatmul.bf16.gmra.mxu0 %v532
    %v546 = vpop.f32.mrf.mxu0
    %v547 = vadd.f32 %v506, %v546
    %v548 = vpop.f32.mrf.mxu0
    %v549 = vadd.f32 %v506, %v548
    %550 = vmatmul.bf16.gmra.mxu0 %v535
    %v551 = vpop.f32.mrf.mxu0
    %v552 = vadd.f32 %v506, %v551
    %v553 = vpop.f32.mrf.mxu0
    %v554 = vadd.f32 %v506, %v553
    %555 = vdwg.mxu0
    %vm556 = vcmp.ge.f32.partialorder %v547, 0.0
    %vm557 = vcmp.ge.f32.partialorder %v549, 0.0
    %vm558 = vcmp.ge.f32.partialorder %v552, 0.0
    %vm559 = vcmp.ge.f32.partialorder %v554, 0.0
    %v560 = vmul.f32 %v547, 0.2
    %v561 = vmul.f32 %v549, 0.2
    %v562 = vmul.f32 %v552, 0.2
    %v563 = vmul.f32 %v554, 0.2
    %v564 = vsel %vm556, %v547, %v560
    %v565 = vsel %vm557, %v549, %v561
    %v566 = vsel %vm558, %v552, %v562
    %v567 = vsel %vm559, %v554, %v563
    %v568 = vpack.c.bf16 %v565, %v564
    %v569 = vpack.c.bf16 %v567, %v566
    %s570 = scalar_lea.vmem [#allocation3], 96
    %v571 = vld [vmem:[%s570] sm:$0xf]
    %v572 = vld [vmem:[%s570 + $0x4] sm:$0xf]
    %v573 = vld [vmem:[%s570 + $0x8] sm:$0xf]
    %v574 = vld [vmem:[%s570 + $0xc] sm:$0xf]
    %v575 = vld [vmem:[%s570 + $0x10] sm:$0xf]
    %v576 = vld [vmem:[%s570 + $0x14] sm:$0xf]
    %v577 = vld [vmem:[%s570 + $0x18] sm:$0xf]
    %v578 = vld [vmem:[%s570 + $0x1c] sm:$0xf]
    %v579 = vld [vmem:[%s2 + $0x2] sm:$0x1]
    %v580 = vperm.slane %v579, 0
    %v589 = vunpack.c.l.b16 %v571
    %v590 = vunpack.c.l.b16 %v572
    %v591 = vunpack.c.l.b16 %v573
    %v592 = vunpack.c.l.b16 %v574
    %v593 = vunpack.c.l.b16 %v575
    %v594 = vunpack.c.l.b16 %v576
    %v595 = vunpack.c.l.b16 %v577
    %v596 = vunpack.c.l.b16 %v578
    %v597 = vpack.c.b16 %v590, %v589
    %v598 = vpack.c.b16 %v592, %v591
    %v599 = vpack.c.b16 %v594, %v593
    %v600 = vpack.c.b16 %v596, %v595
    %v606 = vsel %vm382, %v568, 0
    %v609 = vsel %vm382, %v569, 0
    %611 = vmatpush.bf16.msra.mxu0 0
    %612 = vmatpush.bf16.msra.mxu0 0
    %613 = vmatpush.bf16.msra.mxu0 0
    %614 = vmatpush.bf16.msra.mxu0 0
    %615 = vmatpush.bf16.msra.mxu0 %v600
    %616 = vmatpush.bf16.msra.mxu0 %v599
    %617 = vmatpush.bf16.msra.mxu0 %v598
    %618 = vmatpush.bf16.msra.mxu0 %v597
    %619 = vmatmul.bf16.gmra.mxu0 %v606
    %v620 = vpop.f32.mrf.mxu0
    %v621 = vadd.f32 %v580, %v620
    %v622 = vpop.f32.mrf.mxu0
    %v623 = vadd.f32 %v580, %v622
    %624 = vmatmul.bf16.gmra.mxu0 %v609
    %v625 = vpop.f32.mrf.mxu0
    %v626 = vadd.f32 %v580, %v625
    %v627 = vpop.f32.mrf.mxu0
    %v628 = vadd.f32 %v580, %v627
    %629 = vdwg.mxu0
    %vm630 = vcmp.ge.f32.partialorder %v621, 0.0
    %vm631 = vcmp.ge.f32.partialorder %v623, 0.0
    %vm632 = vcmp.ge.f32.partialorder %v626, 0.0
    %vm633 = vcmp.ge.f32.partialorder %v628, 0.0
    %v634 = vmul.f32 %v621, 0.2
    %v635 = vmul.f32 %v623, 0.2
    %v636 = vmul.f32 %v626, 0.2
    %v637 = vmul.f32 %v628, 0.2
    %v638 = vsel %vm630, %v621, %v634
    %v639 = vsel %vm631, %v623, %v635
    %v640 = vsel %vm632, %v626, %v636
    %v641 = vsel %vm633, %v628, %v637
    %v642 = vld [vmem:[%s2 + $0x3] sm:$0x1]
    %v643 = vperm.slane %v642, 0
    %v644 = vmul.f32 %v638, %v643
    %v645 = vmul.f32 %v639, %v643
    %v646 = vmul.f32 %v640, %v643
    %v647 = vmul.f32 %v641, %v643
    %v648 = vsel %vm382, %v644, 0.0
    %649 = vadd.xlane.f32.xlu0 %v648
    %v650 = vpop.xlane.xlu0 %649
    %v651 = vsel %vm382, %v645, 0.0
    %652 = vadd.xlane.f32.xlu0 %v651
    %v653 = vpop.xlane.xlu0 %652
    %v654 = vsel %vm382, %v646, 0.0
    %655 = vadd.xlane.f32.xlu0 %v654
    %v656 = vpop.xlane.xlu0 %655
    %v657 = vsel %vm382, %v647, 0.0
    %658 = vadd.xlane.f32.xlu0 %v657
    %v659 = vpop.xlane.xlu0 %658
    %s660 = sld [smem:[#allocation2]]
    %v661 = vstv %s660
    %v662 = vadd.f32 %v650, %v661
    %v663 = vadd.f32 %v653, %v661
    %v664 = vadd.f32 %v656, %v661
    %v665 = vadd.f32 %v659, %v661
    %v666 = vxor.u32 %v662, 2147483648
    %v667 = vxor.u32 %v663, 2147483648
    %v668 = vxor.u32 %v664, 2147483648
    %v669 = vxor.u32 %v665, 2147483648
    %v670 = vmul.f32 %v666, 1.442695
    %v671 = vpow.pop %v670
    %v672 = vmul.f32 %v667, 1.442695
    %v673 = vpow.pop %v672
    %v674 = vmul.f32 %v668, 1.442695
    %v675 = vpow.pop %v674
    %v676 = vmul.f32 %v669, 1.442695
    %v677 = vpow.pop %v676
    %v678 = vadd.f32 %v671, 1.0
    %v679 = vadd.f32 %v673, 1.0
    %v680 = vadd.f32 %v675, 1.0
    %v681 = vadd.f32 %v677, 1.0
    %v682 = vrcp.pop %v678
    %v683 = vmul.f32 %v678, %v682
    %v684 = vsub.f32 1.0, %v683
    %v685 = vmul.f32 %v682, %v684
    %v686 = vadd.f32 %v682, %v685
    %vm687 = vweird.f32 %v678
    %vm688 = vweird.f32 %v682
    %vm689 = vmor %vm687, %vm688
    %v690 = vsel %vm689, %v682, %v686
    %v691 = vand.u32 2147483647, %v678
    %vm692 = vcmp.eq.f32.partialorder %v691, 8.507059e+37
    %v693 = vand.u32 %v678, 2147483648
    %v694 = vor.u32 1.1754944e-38, %v693
    %v695 = vsel %vm692, %v694, %v690
    %v696 = vmul.f32 1.0, %v695
    %v697 = vrcp.pop %v679
    %v698 = vmul.f32 %v679, %v697
    %v699 = vsub.f32 1.0, %v698
    %v700 = vmul.f32 %v697, %v699
    %v701 = vadd.f32 %v697, %v700
    %vm702 = vweird.f32 %v679
    %vm703 = vweird.f32 %v697
    %vm704 = vmor %vm702, %vm703
    %v705 = vsel %vm704, %v697, %v701
    %v706 = vand.u32 2147483647, %v679
    %vm707 = vcmp.eq.f32.partialorder %v706, 8.507059e+37
    %v708 = vand.u32 %v679, 2147483648
    %v709 = vor.u32 1.1754944e-38, %v708
    %v710 = vsel %vm707, %v709, %v705
    %v711 = vmul.f32 1.0, %v710
    %v712 = vrcp.pop %v680
    %v713 = vmul.f32 %v680, %v712
    %v714 = vsub.f32 1.0, %v713
    %v715 = vmul.f32 %v712, %v714
    %v716 = vadd.f32 %v712, %v715
    %vm717 = vweird.f32 %v680
    %vm718 = vweird.f32 %v712
    %vm719 = vmor %vm717, %vm718
    %v720 = vsel %vm719, %v712, %v716
    %v721 = vand.u32 2147483647, %v680
    %vm722 = vcmp.eq.f32.partialorder %v721, 8.507059e+37
    %v723 = vand.u32 %v680, 2147483648
    %v724 = vor.u32 1.1754944e-38, %v723
    %v725 = vsel %vm722, %v724, %v720
    %v726 = vmul.f32 1.0, %v725
    %v727 = vrcp.pop %v681
    %v728 = vmul.f32 %v681, %v727
    %v729 = vsub.f32 1.0, %v728
    %v730 = vmul.f32 %v727, %v729
    %v731 = vadd.f32 %v727, %v730
    %vm732 = vweird.f32 %v681
    %vm733 = vweird.f32 %v727
    %vm734 = vmor %vm732, %vm733
    %v735 = vsel %vm734, %v727, %v731
    %v736 = vand.u32 2147483647, %v681
    %vm737 = vcmp.eq.f32.partialorder %v736, 8.507059e+37
    %v738 = vand.u32 %v681, 2147483648
    %v739 = vor.u32 1.1754944e-38, %v738
    %v740 = vsel %vm737, %v739, %v735
    %v741 = vmul.f32 1.0, %v740
    %v742 = vmul.f32 %v696, 10.0
    %v743 = vmul.f32 %v711, 10.0
    %v744 = vmul.f32 %v726, 10.0
    %v745 = vmul.f32 %v741, 10.0
    %vm746 = vcmask 7168
    %747 = vst.msk [vmem:[%s4] sm:$0xff] %vm746, %v742
    %748 = vst.msk [vmem:[%s4 + $0x8] sm:$0xff] %vm746, %v743
    %749 = vst.msk [vmem:[%s4 + $0x10] sm:$0xff] %vm746, %v744
    %750 = vst.msk [vmem:[%s4 + $0x18] sm:$0xff] %vm746, %v745
    // Predicated region
    $region22: #{simple_linear_forward.1} parent=1 // pred_check
      _
    $region23: #{simple_linear_forward.1} parent=1 // pred_check_branch
      %752 = sbr.rel (0) target = $region25
    $region24: #{simple_linear_forward.1} parent=1 // pred_region
      _
    $region25: #{simple_linear_forward.1} parent=1 // pred_fallthru
      _
    // Predicated region
    $region26: #{simple_linear_forward.1} parent=1 // pred_check
      _
    $region27: #{simple_linear_forward.1} parent=1 // pred_check_branch
      %754 = sbr.rel (0) target = $region29
    $region28: #{simple_linear_forward.1} parent=1 // pred_region
      _
    $region29: #{simple_linear_forward.1} parent=1 // pred_fallthru
      _
    %755 = vsyncpa [#allocation4], 1

</llo_original>
